<compile_context>
chip_gen: v7x
topology: tpu7x:2x2x1
jax: 0.10.0
libtpu: 0.0.40
codegen_flags: <defaults>
</compile_context>

<pallas_src>
import functools

import jax
import jax.numpy as jnp
from jax.experimental import pallas as pl
from jax.experimental.pallas import tpu as pltpu


def _ta_kernel(x_ref, w1_ref, w2_ref, o_ref, sum_ref, max_ref,
               *, s_true, ts, needs_mask):
    # x_ref block: (1, T, ts); w1: (Th, T); w2: (T, Th); o_ref block: (1, T, 1)
    s = pl.program_id(1)

    @pl.when(s == 0)
    def _init():
        sum_ref[...] = jnp.zeros_like(sum_ref)
        max_ref[...] = jnp.full_like(max_ref, -jnp.inf)

    x = x_ref[0].astype(jnp.float32)                        # (T, ts)

    # Running sum over the flattened spatial axis (padding lanes are zeros).
    sum_ref[...] += jnp.sum(x, axis=-1, keepdims=True)      # (T, 1)

    # Running max; mask out padded lanes (only exists when S was padded).
    if needs_mask:
        col = s * ts + jax.lax.broadcasted_iota(jnp.int32, x.shape, 1)
        xm = jnp.where(col < s_true, x, -jnp.inf)
    else:
        xm = x
    max_ref[...] = jnp.maximum(max_ref[...],
                               jnp.max(xm, axis=-1, keepdims=True))

    @pl.when(s == pl.num_programs(1) - 1)
    def _finalize():
        w1 = w1_ref[...]                                    # (Th, T)
        w2 = w2_ref[...]                                    # (T, Th)
        avg = sum_ref[...] * (1.0 / s_true)                 # (T, 1)
        mx = max_ref[...]                                   # (T, 1)

        # Shared MLP: two bias-free 1x1x1 convs over the T ("channel") dim.
        # Broadcast-multiply + lane reduce: stays on VPU/XLU, off the MXU.
        def shared_mlp(v):                                  # v: (T, 1)
            h = jnp.sum(w1 * v[:, 0][None, :], axis=1, keepdims=True)   # (Th,1)
            h = jnp.maximum(h, 0.0)                                      # ReLU
            return jnp.sum(w2 * h[:, 0][None, :], axis=1, keepdims=True)  # (T,1)

        gate = jax.nn.sigmoid(shared_mlp(avg) + shared_mlp(mx))          # (T,1)
        o_ref[0] = gate.astype(o_ref.dtype)


def ta_forward(x, w1, w2):
    """x: (N, T, C, H, W); w1: (T//ratio, T); w2: (T, T//ratio).

    Returns sigmoid(MLP(avgpool(x)) + MLP(maxpool(x))) with shape (N, T, 1, 1, 1),
    exactly like the PyTorch TimeAttention.forward.
    """
    N, T, C, H, W = x.shape
    Th = w1.shape[0]
    S = C * H * W
    itemsize = jnp.dtype(x.dtype).itemsize

    # --- choose the lane tile -------------------------------------------------
    # Cap the (T, ts) input block at ~512 KiB (double-buffered ~1 MiB: safe on
    # v5e's 16 MiB default scoped VMEM and v7x's 64 MiB physical VMEM), and aim
    # for >= 4 S-tiles so small-N grids still pipeline / use both v7x cores.
    target_block_bytes = 512 * 1024
    ts_cap = max(128, ((target_block_bytes // (T * itemsize)) // 128) * 128)
    ts_fair = max(128, ((pl.cdiv(S, 4) + 127) // 128) * 128)
    ts = min(ts_cap, ts_fair)

    n_s = pl.cdiv(S, ts)
    S_pad = n_s * ts
    needs_mask = S_pad != S

    xf = x.reshape(N, T, S)
    if needs_mask:
        # Zero-pad so every tile is lane-dense; zeros are masked out of the max.
        xf = jnp.pad(xf, ((0, 0), (0, 0), (0, S_pad - S)))

    block_bytes = T * ts * itemsize
    vmem_limit = int(min(64 * 1024 * 1024,
                         max(4 * 1024 * 1024, 4 * block_bytes + (2 << 20))))

    cost = pl.CostEstimate(
        flops=2 * N * T * S_pad + 8 * N * T * Th,       # sum + max, tiny MLP
        transcendentals=2 * N * T,                       # sigmoid (+ exp)
        bytes_accessed=N * T * S_pad * itemsize + N * T * itemsize
                       + 2 * T * Th * 4,
    )

    kernel = functools.partial(_ta_kernel, s_true=S, ts=ts,
                               needs_mask=needs_mask)

    out = pl.pallas_call(
        kernel,
        out_shape=jax.ShapeDtypeStruct((N, T, 1), x.dtype),
        grid_spec=pltpu.PrefetchScalarGridSpec(
            num_scalar_prefetch=0,
            grid=(N, n_s),
            in_specs=[
                pl.BlockSpec((1, T, ts), lambda n, s: (n, 0, s)),
                pl.BlockSpec((Th, T), lambda n, s: (0, 0)),
                pl.BlockSpec((T, Th), lambda n, s: (0, 0)),
            ],
            out_specs=pl.BlockSpec((1, T, 1), lambda n, s: (n, 0, 0)),
            scratch_shapes=[
                pltpu.VMEM((T, 1), jnp.float32),   # running sum
                pltpu.VMEM((T, 1), jnp.float32),   # running max
            ],
        ),
        compiler_params=pltpu.CompilerParams(
            dimension_semantics=("parallel", "arbitrary"),
            vmem_limit_bytes=vmem_limit,
        ),
        cost_estimate=cost,
    )(xf, w1, w2)

    return out.reshape(N, T, 1, 1, 1)


def ta_reference(x, w1, w2):
    """Pure-JAX reference matching the PyTorch TimeAttention.forward."""
    avg = jnp.mean(x, axis=(2, 3, 4))                  # (N, T)
    mx = jnp.max(x, axis=(2, 3, 4))                    # (N, T)

    def mlp(v):                                        # (N, T)
        h = jnp.maximum(v @ w1.T, 0.0)                 # (N, Th)
        return h @ w2.T                                # (N, T)

    scale = jax.nn.sigmoid(mlp(avg) + mlp(mx))         # (N, T)
    return scale[:, :, None, None, None].astype(x.dtype)


if __name__ == "__main__":
    timeWindows = 8
    ratio = 4
    N, T, C, H, W = 2, timeWindows, 4, 16, 16
    Th = T // ratio

    key = jax.random.PRNGKey(0)
    kx, k1, k2 = jax.random.split(key, 3)

    # Deterministic synthetic inputs (Conv3d 1x1x1 weights, no bias).
    x = jax.random.normal(kx, (N, T, C, H, W), dtype=jnp.float32)
    w1 = jax.random.normal(k1, (Th, T), dtype=jnp.float32) * (1.0 / T) ** 0.5
    w2 = jax.random.normal(k2, (T, Th), dtype=jnp.float32) * (1.0 / Th) ** 0.5

    out = ta_forward(x, w1, w2)
    out = jax.block_until_ready(out)

    ref = ta_reference(x, w1, w2)
    assert out.shape == (N, T, 1, 1, 1)
    assert jnp.allclose(out, ref, atol=1e-5, rtol=1e-5), "mismatch vs reference"

    print("KERNEL_OK")
</pallas_src>

<mosaic_0001>
module attributes {stable_mosaic.version = 11 : i64} {
  func.func @_ta_kernel(%arg0: i32, %arg1: i32, %arg2: memref<1x8x256xf32, #tpu.memory_space<vmem>>, %arg3: memref<2x8xf32, #tpu.memory_space<vmem>>, %arg4: memref<8x2xf32, #tpu.memory_space<vmem>>, %arg5: memref<1x8x1xf32, #tpu.memory_space<vmem>>, %arg6: memref<8x1xf32, #tpu.memory_space<vmem>>, %arg7: memref<8x1xf32, #tpu.memory_space<vmem>>) attributes {dimension_semantics = [#tpu.dimension_semantics<parallel>, #tpu.dimension_semantics<arbitrary>], iteration_bounds = array<i64: 2, 4>, scalar_prefetch = 0 : i64, scratch_operands = 2 : i64, tpu.core_type = #tpu.core_type<tc>, window_params = [{transform_indices = @transform_0, window_bounds = array<i64: 1, 8, 256>}, {pipeline_mode = #tpu.pipeline_mode<synchronous>, transform_indices = @transform_1, window_bounds = array<i64: 2, 8>}, {pipeline_mode = #tpu.pipeline_mode<synchronous>, transform_indices = @transform_2, window_bounds = array<i64: 8, 2>}, {transform_indices = @transform_3, window_bounds = array<i64: 1, 8, 1>}]} {
    %c0_i32 = arith.constant 0 : i32
    %0 = arith.cmpi eq, %arg1, %c0_i32 : i32
    %1 = arith.extui %0 : i1 to i32
    %c0_i32_0 = arith.constant 0 : i32
    %2 = arith.cmpi ne, %1, %c0_i32_0 : i32
    scf.if %2 {
      %cst_13 = arith.constant 0.000000e+00 : f32
      %18 = vector.broadcast %cst_13 : f32 to vector<8x1xf32>
      %c0_14 = arith.constant 0 : index
      %c0_15 = arith.constant 0 : index
      %19 = vector.load %arg6[%c0_14, %c0_15] : memref<8x1xf32, #tpu.memory_space<vmem>>, vector<8x1xf32>
      tpu.vector_store %arg6[%c0_14, %c0_15], %18 {strides = array<i32>} : memref<8x1xf32, #tpu.memory_space<vmem>>, vector<8x1xf32>,
      %cst_16 = arith.constant 0xFF800000 : f32
      %20 = vector.broadcast %cst_16 : f32 to vector<8x1xf32>
      %c0_17 = arith.constant 0 : index
      %c0_18 = arith.constant 0 : index
      %21 = vector.load %arg7[%c0_17, %c0_18] : memref<8x1xf32, #tpu.memory_space<vmem>>, vector<8x1xf32>
      tpu.vector_store %arg7[%c0_17, %c0_18], %20 {strides = array<i32>} : memref<8x1xf32, #tpu.memory_space<vmem>>, vector<8x1xf32>,
    } else {
    }
    %c0 = arith.constant 0 : index
    %c0_1 = arith.constant 0 : index
    %c0_2 = arith.constant 0 : index
    %3 = vector.load %arg2[%c0, %c0_1, %c0_2] : memref<1x8x256xf32, #tpu.memory_space<vmem>>, vector<1x8x256xf32>
    %4 = vector.shape_cast %3 : vector<1x8x256xf32> to vector<8x256xf32>
    %c0_3 = arith.constant 0 : index
    %c0_4 = arith.constant 0 : index
    %5 = vector.load %arg6[%c0_3, %c0_4] : memref<8x1xf32, #tpu.memory_space<vmem>>, vector<8x1xf32>
    %cst = arith.constant dense<0.000000e+00> : vector<8xf32>
    %6 = vector.multi_reduction <add>, %4, %cst [1] : vector<8x256xf32> to vector<8xf32>
    %7 = vector.shape_cast %6 : vector<8xf32> to vector<8x1xf32>
    %8 = arith.addf %5, %7 : vector<8x1xf32>
    %c0_5 = arith.constant 0 : index
    %c0_6 = arith.constant 0 : index
    %9 = vector.load %arg6[%c0_5, %c0_6] : memref<8x1xf32, #tpu.memory_space<vmem>>, vector<8x1xf32>
    tpu.vector_store %arg6[%c0_5, %c0_6], %8 {strides = array<i32>} : memref<8x1xf32, #tpu.memory_space<vmem>>, vector<8x1xf32>,
    %c0_7 = arith.constant 0 : index
    %c0_8 = arith.constant 0 : index
    %10 = vector.load %arg7[%c0_7, %c0_8] : memref<8x1xf32, #tpu.memory_space<vmem>>, vector<8x1xf32>
    %cst_9 = arith.constant dense<0xFF800000> : vector<8xf32>
    %11 = vector.multi_reduction <maximumf>, %4, %cst_9 [1] : vector<8x256xf32> to vector<8xf32>
    %12 = vector.shape_cast %11 : vector<8xf32> to vector<8x1xf32>
    %13 = arith.maximumf %10, %12 : vector<8x1xf32>
    %c0_10 = arith.constant 0 : index
    %c0_11 = arith.constant 0 : index
    %14 = vector.load %arg7[%c0_10, %c0_11] : memref<8x1xf32, #tpu.memory_space<vmem>>, vector<8x1xf32>
    tpu.vector_store %arg7[%c0_10, %c0_11], %13 {strides = array<i32>} : memref<8x1xf32, #tpu.memory_space<vmem>>, vector<8x1xf32>,
    %c3_i32 = arith.constant 3 : i32
    %15 = arith.cmpi eq, %arg1, %c3_i32 : i32
    %16 = arith.extui %15 : i1 to i32
    %c0_i32_12 = arith.constant 0 : i32
    %17 = arith.cmpi ne, %16, %c0_i32_12 : i32
    scf.if %17 {
      %c0_13 = arith.constant 0 : index
      %c0_14 = arith.constant 0 : index
      %18 = vector.load %arg3[%c0_13, %c0_14] : memref<2x8xf32, #tpu.memory_space<vmem>>, vector<2x8xf32>
      %c0_15 = arith.constant 0 : index
      %c0_16 = arith.constant 0 : index
      %19 = vector.load %arg4[%c0_15, %c0_16] : memref<8x2xf32, #tpu.memory_space<vmem>>, vector<8x2xf32>
      %c0_17 = arith.constant 0 : index
      %c0_18 = arith.constant 0 : index
      %20 = vector.load %arg6[%c0_17, %c0_18] : memref<8x1xf32, #tpu.memory_space<vmem>>, vector<8x1xf32>
      %cst_19 = arith.constant 9.765625E-4 : f32
      %21 = vector.broadcast %cst_19 : f32 to vector<8x1xf32>
      %22 = arith.mulf %20, %21 : vector<8x1xf32>
      %c0_20 = arith.constant 0 : index
      %c0_21 = arith.constant 0 : index
      %23 = vector.load %arg7[%c0_20, %c0_21] : memref<8x1xf32, #tpu.memory_space<vmem>>, vector<8x1xf32>
      %24 = vector.shape_cast %22 : vector<8x1xf32> to vector<8xf32>
      %25 = vector.shape_cast %24 : vector<8xf32> to vector<1x8xf32>
      %26 = vector.broadcast %25 : vector<1x8xf32> to vector<2x8xf32>
      %27 = arith.mulf %18, %26 : vector<2x8xf32>
      %cst_22 = arith.constant dense<0.000000e+00> : vector<2xf32>
      %28 = vector.multi_reduction <add>, %27, %cst_22 [1] : vector<2x8xf32> to vector<2xf32>
      %29 = vector.shape_cast %28 : vector<2xf32> to vector<2x1xf32>
      %cst_23 = arith.constant 0.000000e+00 : f32
      %30 = vector.broadcast %cst_23 : f32 to vector<2x1xf32>
      %31 = arith.maximumf %29, %30 : vector<2x1xf32>
      %32 = vector.shape_cast %31 : vector<2x1xf32> to vector<2xf32>
      %33 = vector.shape_cast %32 : vector<2xf32> to vector<1x2xf32>
      %34 = vector.broadcast %33 : vector<1x2xf32> to vector<8x2xf32>
      %35 = arith.mulf %19, %34 : vector<8x2xf32>
      %cst_24 = arith.constant dense<0.000000e+00> : vector<8xf32>
      %36 = vector.multi_reduction <add>, %35, %cst_24 [1] : vector<8x2xf32> to vector<8xf32>
      %37 = vector.shape_cast %36 : vector<8xf32> to vector<8x1xf32>
      %38 = vector.shape_cast %23 : vector<8x1xf32> to vector<8xf32>
      %39 = vector.shape_cast %38 : vector<8xf32> to vector<1x8xf32>
      %40 = vector.broadcast %39 : vector<1x8xf32> to vector<2x8xf32>
      %41 = arith.mulf %18, %40 : vector<2x8xf32>
      %cst_25 = arith.constant dense<0.000000e+00> : vector<2xf32>
      %42 = vector.multi_reduction <add>, %41, %cst_25 [1] : vector<2x8xf32> to vector<2xf32>
      %43 = vector.shape_cast %42 : vector<2xf32> to vector<2x1xf32>
      %cst_26 = arith.constant 0.000000e+00 : f32
      %44 = vector.broadcast %cst_26 : f32 to vector<2x1xf32>
      %45 = arith.maximumf %43, %44 : vector<2x1xf32>
      %46 = vector.shape_cast %45 : vector<2x1xf32> to vector<2xf32>
      %47 = vector.shape_cast %46 : vector<2xf32> to vector<1x2xf32>
      %48 = vector.broadcast %47 : vector<1x2xf32> to vector<8x2xf32>
      %49 = arith.mulf %19, %48 : vector<8x2xf32>
      %cst_27 = arith.constant dense<0.000000e+00> : vector<8xf32>
      %50 = vector.multi_reduction <add>, %49, %cst_27 [1] : vector<8x2xf32> to vector<8xf32>
      %51 = vector.shape_cast %50 : vector<8xf32> to vector<8x1xf32>
      %52 = arith.addf %37, %51 : vector<8x1xf32>
      %53 = arith.negf %52 : vector<8x1xf32>
      %54 = math.exp %53 : vector<8x1xf32>
      %cst_28 = arith.constant 1.000000e+00 : f32
      %55 = vector.broadcast %cst_28 : f32 to vector<8x1xf32>
      %56 = arith.addf %55, %54 : vector<8x1xf32>
      %57 = arith.divf %55, %56 : vector<8x1xf32>
      %c0_29 = arith.constant 0 : index
      %c0_30 = arith.constant 0 : index
      %c0_31 = arith.constant 0 : index
      %58 = vector.load %arg5[%c0_29, %c0_30, %c0_31] : memref<1x8x1xf32, #tpu.memory_space<vmem>>, vector<1x8x1xf32>
      %59 = vector.shape_cast %58 : vector<1x8x1xf32> to vector<8x1xf32>
      %60 = vector.shape_cast %57 : vector<8x1xf32> to vector<1x8x1xf32>
      tpu.vector_store %arg5[%c0_29, %c0_30, %c0_31], %60 {strides = array<i32>} : memref<1x8x1xf32, #tpu.memory_space<vmem>>, vector<1x8x1xf32>,
    } else {
    }
    return
  }
  func.func @transform_0(%arg0: i32, %arg1: i32) -> (i32, i32, i32) {
    %c0_i32 = arith.constant 0 : i32
    %c0_i32_0 = arith.constant 0 : i32
    return %arg0, %c0_i32, %arg1 : i32, i32, i32
  }
  func.func @transform_1(%arg0: i32, %arg1: i32) -> (i32, i32) {
    %c0_i32 = arith.constant 0 : i32
    %c0_i32_0 = arith.constant 0 : i32
    %c0_i32_1 = arith.constant 0 : i32
    return %c0_i32, %c0_i32_0 : i32, i32
  }
  func.func @transform_2(%arg0: i32, %arg1: i32) -> (i32, i32) {
    %c0_i32 = arith.constant 0 : i32
    %c0_i32_0 = arith.constant 0 : i32
    %c0_i32_1 = arith.constant 0 : i32
    return %c0_i32, %c0_i32_0 : i32, i32
  }
  func.func @transform_3(%arg0: i32, %arg1: i32) -> (i32, i32, i32) {
    %c0_i32 = arith.constant 0 : i32
    %c0_i32_0 = arith.constant 0 : i32
    %c0_i32_1 = arith.constant 0 : i32
    return %arg0, %c0_i32, %c0_i32_0 : i32, i32, i32
  }
}

</mosaic_0001>

<llo_original>
// kernel: tpu_custom_call.1
$region0: #{tpu_custom_call.1}
  #allocation0 [shape = 'u32[]', space=smem, size = 0x4, offset = 0x4, fixed_abs, tag = 'smem constant byte address 0x4 - core index']
  #allocation1 [shape = 'u32[144,128]{1,0:T(1,128)}', space=vmem, size = 0x12000, scoped, tag = 'internal scratch']
  #allocation2 [shape = 'f32[8,1]{1,0:T(8,128)}', space=vmem, size = 0x1000, scoped, tag = 'scratch operand']
  #allocation3 [shape = 'f32[8,1]{1,0:T(8,128)}', space=vmem, size = 0x1000, scoped, tag = 'scratch operand']
  %s0 = inlined_call_operand.hbm [shape: f32[2,8,1024], index: 0, kind: input, shape index: {}]
  %s1 = inlined_call_operand.vmem [shape: f32[2,8], index: 1, kind: input, shape index: {}]
  %s2 = inlined_call_operand.vmem [shape: f32[8,2], index: 2, kind: input, shape index: {}]
  %s3 = inlined_call_operand.vmem [shape: f32[2,8,1], index: 3, kind: output, shape index: {}]
  %s4 = sld [smem:[#allocation0]]
  $region57: #{tpu_custom_call.1} parent=0
    _
  %s6 = ssub.s32 1, %s4
  %s7 = scalar_select 0, %s6, %s4
  $region1: #{tpu_custom_call.1} parent=0
    #allocation4 [shape = 'u8[16384]{0}', space=vmem, size = 0x4000, scoped, tag = 'input window, operand 0']
    #allocation5 [shape = 's32[2]{0}', space=sflag, size = 0x8, scoped, tag = 'scoped memory for tpu_custom_call.1']
    %8 = vsyncpa [#allocation5], 0
    %s9 = scalar_lea.sflag [#allocation5], 1
    %10 = vsyncpa %s9, 0
    loop: start=0, step=1, limit=10
    $region2: #{tpu_custom_call.1} parent=1 // loop_pre_header
      _
    $region3: #{tpu_custom_call.1} parent=1 // loop_header
      %s12 = sphi 0, %s16
      %p13 = scmp.ge.s32.totalorder %s12, 10
      %s19 = sphi 0, %s31
      %s20 = sphi 0, %s27
      %s21 = sphi 0, %s19
      %s22 = sphi 0, %s20
      %s23 = sphi 0, %s21
      %s24 = sphi 0, %s22
      %s36 = sphi 0, %s38
      %s39 = sphi 0, %s36
      %s40 = sphi 0, %s39
      %s56 = sphi 0, %s40
      %s60 = sphi 0, %s60
      %s62 = sphi 0, %s60
      %s63 = sphi 0, %s62
      %s77 = sphi 0, %s63
      %s81 = sphi 0, %s81
      %s83 = sphi 0, %s81
      %s84 = sphi 0, %s83
      %s98 = sphi 0, %s84
      %s104 = sphi 0, %s106
      %s107 = sphi 0, %s104
      %s108 = sphi 0, %s107
      %s124 = sphi 0, %s108
    $region4: #{tpu_custom_call.1} parent=1 // loop_header_branch
      %15 = sbr.rel (%p13) target = $region8
    $region5: #{tpu_custom_call.1} parent=1 // loop_body
      %s17 = ssub.s32 %s12, 1
      %s18 = ssub.s32 %s12, 2
      %s25 = sadd.s32 1, %s20
      %p26 = scmp.ge.s32.totalorder %s25, 4
      %s27 = scalar_select %p26, 0, %s25
      %s28 = sadd.s32 1, %s19
      %s29 = scalar_select %p26, %s28, %s19
      %p30 = scmp.ge.s32.totalorder %s29, 2
      %s31 = scalar_select %p30, 0, %s29
      %s32 = ssub.s32 %s19, %s31
      %s33 = ssub.s32 %s20, %s27
      %s34 = sor.u32 %s32, %s33
      %p35 = scmp.eq.s32.totalorder %s34, 0
      %s37 = sadd.s32 %s36, 1
      %s38 = scalar_select %p35, %s36, %s37
      %p41 = pneg %p35
      %p42 = scmp.eq.s32.totalorder %s12, 7
      %p43 = por %p41, %p42
      %p44 = scmp.ne.s32.totalorder %s36, %s39
      %p45 = scmp.eq.s32.totalorder %s12, 0
      %p46 = por %p44, %p45
      %p47 = scmp.ne.s32.totalorder %s36, %s39
      %p48 = scmp.eq.s32.totalorder %s17, 7
      %p49 = por %p47, %p48
      %p50 = scmp.ne.s32.totalorder %s39, %s40
      %p51 = scmp.eq.s32.totalorder %s17, 0
      %p52 = por %p50, %p51
      %p53 = scmp.ne.s32.totalorder %s39, %s40
      %p54 = scmp.eq.s32.totalorder %s18, 7
      %p55 = por %p53, %p54
      %p57 = scmp.ne.s32.totalorder %s40, %s56
      %p58 = scmp.eq.s32.totalorder %s18, 0
      %p59 = por %p57, %p58
      %s61 = sadd.s32 %s60, 1
      %p64 = scmp.eq.s32.totalorder %s12, 7
      %p65 = scmp.ne.s32.totalorder %s60, %s62
      %p66 = scmp.eq.s32.totalorder %s12, 0
      %p67 = por %p65, %p66
      %p68 = scmp.ne.s32.totalorder %s60, %s62
      %p69 = scmp.eq.s32.totalorder %s17, 7
      %p70 = por %p68, %p69
      %p71 = scmp.ne.s32.totalorder %s62, %s63
      %p72 = scmp.eq.s32.totalorder %s17, 0
      %p73 = por %p71, %p72
      %p74 = scmp.ne.s32.totalorder %s62, %s63
      %p75 = scmp.eq.s32.totalorder %s18, 7
      %p76 = por %p74, %p75
      %p78 = scmp.ne.s32.totalorder %s63, %s77
      %p79 = scmp.eq.s32.totalorder %s18, 0
      %p80 = por %p78, %p79
      %s82 = sadd.s32 %s81, 1
      %p85 = scmp.eq.s32.totalorder %s12, 7
      %p86 = scmp.ne.s32.totalorder %s81, %s83
      %p87 = scmp.eq.s32.totalorder %s12, 0
      %p88 = por %p86, %p87
      %p89 = scmp.ne.s32.totalorder %s81, %s83
      %p90 = scmp.eq.s32.totalorder %s17, 7
      %p91 = por %p89, %p90
      %p92 = scmp.ne.s32.totalorder %s83, %s84
      %p93 = scmp.eq.s32.totalorder %s17, 0
      %p94 = por %p92, %p93
      %p95 = scmp.ne.s32.totalorder %s83, %s84
      %p96 = scmp.eq.s32.totalorder %s18, 7
      %p97 = por %p95, %p96
      %p99 = scmp.ne.s32.totalorder %s84, %s98
      %p100 = scmp.eq.s32.totalorder %s18, 0
      %p101 = por %p99, %p100
      %s102 = ssub.s32 %s19, %s31
      %p103 = scmp.eq.s32.totalorder %s102, 0
      %s105 = sadd.s32 %s104, 1
      %s106 = scalar_select %p103, %s104, %s105
      %p109 = pneg %p103
      %p110 = scmp.eq.s32.totalorder %s12, 7
      %p111 = por %p109, %p110
      %p112 = scmp.ne.s32.totalorder %s104, %s107
      %p113 = scmp.eq.s32.totalorder %s12, 0
      %p114 = por %p112, %p113
      %p115 = scmp.ne.s32.totalorder %s104, %s107
      %p116 = scmp.eq.s32.totalorder %s17, 7
      %p117 = por %p115, %p116
      %p118 = scmp.ne.s32.totalorder %s107, %s108
      %p119 = scmp.eq.s32.totalorder %s17, 0
      %p120 = por %p118, %p119
      %p121 = scmp.ne.s32.totalorder %s107, %s108
      %p122 = scmp.eq.s32.totalorder %s18, 7
      %p123 = por %p121, %p122
      %p125 = scmp.ne.s32.totalorder %s108, %s124
      %p126 = scmp.eq.s32.totalorder %s18, 0
      %p127 = por %p125, %p126
      %p128 = scmp.le.s32.totalorder 1, %s12
      %p129 = scmp.lt.s32.totalorder %s12, 9
      %p130 = pnand %p128, %p129
      %p131 = pneg %p130
      // Predicated region
      $region9: #{tpu_custom_call.1} parent=5 // pred_check
        _
      $region10: #{tpu_custom_call.1} parent=5 // pred_check_branch
        %133 = sbr.rel (%p130) target = $region12
      $region11: #{tpu_custom_call.1} parent=5 // pred_region
        %s134 = ssub.s32 %s12, 1
        // Predicated region
        $region13: #{tpu_custom_call.1} parent=11 // pred_check
          %p135 = pneg %p73
        $region14: #{tpu_custom_call.1} parent=11 // pred_check_branch
          %137 = sbr.rel (%p135) target = $region16
        $region15: #{tpu_custom_call.1} parent=11 // pred_region
          _
        $region16: #{tpu_custom_call.1} parent=11 // pred_fallthru
          _
        // Predicated region
        $region17: #{tpu_custom_call.1} parent=11 // pred_check
          %p138 = pneg %p94
        $region18: #{tpu_custom_call.1} parent=11 // pred_check_branch
          %140 = sbr.rel (%p138) target = $region20
        $region19: #{tpu_custom_call.1} parent=11 // pred_region
          _
        $region20: #{tpu_custom_call.1} parent=11 // pred_fallthru
          _
      $region12: #{tpu_custom_call.1} parent=5 // pred_fallthru
        _
      %p141 = scmp.lt.s32.totalorder %s12, 8
      // Predicated region
      $region21: #{tpu_custom_call.1} parent=5 // pred_check
        %p142 = pneg %p141
      $region22: #{tpu_custom_call.1} parent=5 // pred_check_branch
        %144 = sbr.rel (%p142) target = $region24
      $region23: #{tpu_custom_call.1} parent=5 // pred_region
        // Predicated region
        $region25: #{tpu_custom_call.1} parent=23 // pred_check
          %p145 = pneg %p46
        $region26: #{tpu_custom_call.1} parent=23 // pred_check_branch
          %147 = sbr.rel (%p145) target = $region28
        $region27: #{tpu_custom_call.1} parent=23 // pred_region
          %s148 = sand.u32 %s36, 1
          %s149 = scalar_lea.sflag [#allocation5], %s148
          %s150 = sand.u32 %s36, 1
          %s151 = smul.addr %s150, 16
          %s152 = scalar_lea.vmem [#allocation4], %s151
          %s153 = smul.u32 2, %s20
          %s155 = ssub.s32 256, 256
          %156 = vsyncadd %s149, %s155
          %s157 = smul.addr %s19, 8
          %s158 = sadd.s32 %s153, %s157
          %s159 = smul.addr %s158, 128
          %s160 = scalar_lea.hbm %s0, %s159
          %s162 = sshll.u32 %s152, 4
          %s163 = int_to_ptr.vmem [resolvable:$true] %s162
          %165 = dma.hbm_to_vmem [thread:$0]  %s160, 256, %s163, %s149
        $region28: #{tpu_custom_call.1} parent=23 // pred_fallthru
          _
      $region24: #{tpu_custom_call.1} parent=5 // pred_fallthru
        _
      %p166 = scmp.le.s32.totalorder 1, %s12
      %p167 = scmp.lt.s32.totalorder %s12, 9
      %p168 = pnand %p166, %p167
      %p169 = pneg %p168
      // Predicated region
      $region29: #{tpu_custom_call.1} parent=5 // pred_check
        _
      $region30: #{tpu_custom_call.1} parent=5 // pred_check_branch
        %171 = sbr.rel (%p168) target = $region32
      $region31: #{tpu_custom_call.1} parent=5 // pred_region
        %s172 = ssub.s32 %s12, 1
        %s173 = sand.u32 %s39, 1
        %s174 = scalar_lea.sflag [#allocation5], %s173
        %s175 = sand.u32 %s39, 1
        %s176 = smul.addr %s175, 16
        %s177 = scalar_lea.vmem [#allocation4], %s176
        // Predicated region
        $region33: #{tpu_custom_call.1} parent=31 // pred_check
          %p178 = pneg %p52
        $region34: #{tpu_custom_call.1} parent=31 // pred_check_branch
          %180 = sbr.rel (%p178) target = $region36
        $region35: #{tpu_custom_call.1} parent=31 // pred_region
          %181 = dma.done %s174, 256
        $region36: #{tpu_custom_call.1} parent=31 // pred_fallthru
          _
        %s182 = sand.u32 %s39, 1
        %s183 = scalar_lea.sflag [#allocation5], %s182
        %s184 = sand.u32 %s39, 1
        %s185 = smul.addr %s184, 16
        %s186 = scalar_lea.vmem [#allocation4], %s185
        %p187 = pneg %p52
        %p188 = pneg %p49
        %p189 = pneg %p73
        %p190 = pneg %p70
        %p191 = pneg %p94
        %p192 = pneg %p91
        %p193 = pneg %p120
        %p194 = pneg %p117
        %p195 = scmp.lt.s32.totalorder %s21, 1
        %s196 = scalar_select %p195, %s21, 1
        %s197 = smul.addr %s196, 8
        %s198 = scalar_lea.vmem %s3, %s197
        %s199 = smul.u32 2, %s22
        %p200 = scmp.lt.s32.totalorder %s21, 1
        %s201 = scalar_select %p200, %s21, 1
        %s202 = smul.addr %s201, 8
        %s203 = scalar_lea.vmem %s3, %s202
        %p204 = scmp.eq.s32.totalorder %s22, 0
        // Predicated region
        $region37: #{tpu_custom_call.1} parent=31 // pred_check
          %p205 = pneg %p204
        $region38: #{tpu_custom_call.1} parent=31 // pred_check_branch
          %207 = sbr.rel (%p205) target = $region40
        $region39: #{tpu_custom_call.1} parent=31 // pred_region
          %vm208 = vcmask 7168
          %209 = vst.msk [vmem:[#allocation2] sm:$0xff] %vm208, 0.0
          %210 = vst.msk [vmem:[#allocation3] sm:$0xff] %vm208, -inf
        $region40: #{tpu_custom_call.1} parent=31 // pred_fallthru
          _
        %v211 = vld [vmem:[%s177] sm:$0xff]
        %v212 = vld [vmem:[%s177 + $0x8] sm:$0xff]
        %v213 = vld [vmem:[#allocation2] sm:$0xff]
        %v214 = vadd.f32 %v211, %v212
        %215 = vadd.xlane.f32.xlu0 %v214
        %v216 = vpop.xlane.xlu0 %215
        %v217 = vadd.f32 %v213, %v216
        %vm218 = vcmask 7168
        %219 = vst.msk [vmem:[#allocation2] sm:$0xff] %vm218, %v217
        %v220 = vld [vmem:[#allocation3] sm:$0xff]
        %v221 = vmax.f32 %v211, %v212
        %222 = vmax.xlane.f32.xlu0 %v221
        %v223 = vpop.xlane.xlu0 %222
        %v224 = vmax.f32 %v220, %v223
        %225 = vst.msk [vmem:[#allocation3] sm:$0xff] %vm218, %v224
        %p226 = scmp.eq.s32.totalorder %s22, 3
        // Predicated region
        $region41: #{tpu_custom_call.1} parent=31 // pred_check
          %p227 = pneg %p226
        $region42: #{tpu_custom_call.1} parent=31 // pred_check_branch
          %229 = sbr.rel (%p227) target = $region44
        $region43: #{tpu_custom_call.1} parent=31 // pred_region
          %v230 = vld [vmem:[%s1] sm:$0x3]
          %v231 = vld [vmem:[%s2] sm:$0xff]
          %v232 = vld [vmem:[#allocation2] sm:$0xff]
          %v233 = vmul.f32 %v232, 0.0009765625
          %v234 = vld [vmem:[#allocation3] sm:$0xff]
          %236 = vset.pattern.permute.xlu0 0
          %237 = vperm.xlu0 %236, %v233
          %v238 = vpop.permute.xlu0 %237
          %v239 = vlaneseq
          %v240 = vand.u32 %v239, 127
          %v241 = vlaneseq
          %v242 = vshrl.u32 %v241, 7
          %v243 = vsub.s32 %v240, %v242
          %v244 = vrot.slane %v238, %v243
          %v246 = vmul.f32 %v230, %v244
          %vm247 = vcmask 58368
          %v248 = vsel %vm247, %v246, 0.0
          %249 = vadd.xlane.f32.xlu0 %v248
          %v250 = vpop.xlane.xlu0 %249
          %v251 = vmax.f32 %v250, 0.0
          %v253 = vlaneseq
          %v254 = vshrl.u32 %v253, 7
          %v255 = vsub.s32 %v240, %v254
          %v256 = vrot.slane %v251, %v255
          %vm257 = vcmask 1042434
          %v258 = vsel %vm257, %v256, %v256
          %vm259 = vcmask 1043459
          %v260 = vsel %vm259, %v256, %v258
          %vm261 = vcmask 1044484
          %v262 = vsel %vm261, %v256, %v260
          %vm263 = vcmask 1045509
          %v264 = vsel %vm263, %v256, %v262
          %vm265 = vcmask 1046534
          %v266 = vsel %vm265, %v256, %v264
          %vm267 = vcmask 1047559
          %v268 = vsel %vm267, %v256, %v266
          %v270 = vmul.f32 %v231, %v268
          %vm271 = vcmask 15360
          %v272 = vsel %vm271, %v270, 0.0
          %273 = vadd.xlane.f32.xlu0 %v272
          %v274 = vpop.xlane.xlu0 %273
          %276 = vset.pattern.permute.xlu0 0
          %277 = vperm.xlu0 %276, %v234
          %v278 = vpop.permute.xlu0 %277
          %v279 = vlaneseq
          %v280 = vshrl.u32 %v279, 7
          %v281 = vsub.s32 %v240, %v280
          %v282 = vrot.slane %v278, %v281
          %v284 = vmul.f32 %v230, %v282
          %v285 = vsel %vm247, %v284, 0.0
          %286 = vadd.xlane.f32.xlu0 %v285
          %v287 = vpop.xlane.xlu0 %286
          %v288 = vmax.f32 %v287, 0.0
          %v290 = vlaneseq
          %v291 = vshrl.u32 %v290, 7
          %v292 = vsub.s32 %v240, %v291
          %v293 = vrot.slane %v288, %v292
          %v294 = vsel %vm257, %v293, %v293
          %v295 = vsel %vm259, %v293, %v294
          %v296 = vsel %vm261, %v293, %v295
          %v297 = vsel %vm263, %v293, %v296
          %v298 = vsel %vm265, %v293, %v297
          %v299 = vsel %vm267, %v293, %v298
          %v301 = vmul.f32 %v231, %v299
          %v302 = vsel %vm271, %v301, 0.0
          %303 = vadd.xlane.f32.xlu0 %v302
          %v304 = vpop.xlane.xlu0 %303
          %v305 = vadd.f32 %v274, %v304
          %v306 = vxor.u32 %v305, 2147483648
          %v307 = vmul.f32 %v306, 1.442695
          %v308 = vpow.pop %v307
          %v309 = vadd.f32 %v308, 1.0
          %v310 = vrcp.pop %v309
          %v311 = vmul.f32 1.0, %v310
          %312 = vst.msk [vmem:[%s203] sm:$0xff] %vm218, %v311
        $region44: #{tpu_custom_call.1} parent=31 // pred_fallthru
          _
        %p313 = scmp.lt.s32.totalorder %s21, 1
        %s314 = scalar_select %p313, %s21, 1
        %s315 = smul.addr %s314, 8
        %s316 = scalar_lea.vmem %s3, %s315
        // Predicated region
        $region45: #{tpu_custom_call.1} parent=31 // pred_check
          %p317 = pneg %p117
        $region46: #{tpu_custom_call.1} parent=31 // pred_check_branch
          %319 = sbr.rel (%p317) target = $region48
        $region47: #{tpu_custom_call.1} parent=31 // pred_region
          _
        $region48: #{tpu_custom_call.1} parent=31 // pred_fallthru
          _
      $region32: #{tpu_custom_call.1} parent=5 // pred_fallthru
        _
      %p320 = scmp.le.s32.totalorder 2, %s12
      // Predicated region
      $region49: #{tpu_custom_call.1} parent=5 // pred_check
        %p321 = pneg %p320
      $region50: #{tpu_custom_call.1} parent=5 // pred_check_branch
        %323 = sbr.rel (%p321) target = $region52
      $region51: #{tpu_custom_call.1} parent=5 // pred_region
        %s324 = ssub.s32 %s12, 2
        // Predicated region
        $region53: #{tpu_custom_call.1} parent=51 // pred_check
          %p325 = pneg %p123
        $region54: #{tpu_custom_call.1} parent=51 // pred_check_branch
          %327 = sbr.rel (%p325) target = $region56
        $region55: #{tpu_custom_call.1} parent=51 // pred_region
          %p328 = scmp.lt.s32.totalorder %s23, 1
          %s329 = scalar_select %p328, %s23, 1
          %s330 = smul.addr %s329, 8
          %s331 = scalar_lea.vmem %s3, %s330
        $region56: #{tpu_custom_call.1} parent=51 // pred_fallthru
          _
      $region52: #{tpu_custom_call.1} parent=5 // pred_fallthru
        _
    $region6: #{tpu_custom_call.1} parent=1 // loop_footer
      %s16 = sadd.s32 1, %s12
    $region7: #{tpu_custom_call.1} parent=1 // loop_footer_branch
      %11 = sbr.rel target = $region3
    $region8: #{tpu_custom_call.1} parent=1 // loop_exit
      _
    %332 = vsyncpa [#allocation5], 1
    %s333 = scalar_lea.sflag [#allocation5], 1
    %334 = vsyncpa %s333, 1

</llo_original>
